<compile_context>
chip_gen: v5e
topology: v5e:2x2
jax: 0.10.0
libtpu: 0.0.40
codegen_flags: <defaults>
</compile_context>

<pallas_src>
import functools

import jax
import jax.numpy as jnp
from jax.experimental import pallas as pl
from jax.experimental.pallas import tpu as pltpu

_MiB = 1024 * 1024
_TARGET_STEPS = 8   # aim for >= this many grid steps when B allows it


def _round_up(x, m):
    return ((x + m - 1) // m) * m


def _vmem_budgets():
    """Per-generation (f32 tile budget, vmem_limit cap) in bytes."""
    try:
        cap = int(pltpu.get_tpu_info().vmem_capacity_bytes)
    except Exception:
        cap = 64 * _MiB                 # conservative (v7x-sized) fallback
    if cap >= 96 * _MiB:
        # v5e / v6e: 128 MiB physical VMEM per TC -> big tiles amortize the
        # ~0.35us/step grid overhead and reach the 85%+ HBM-roofline regime.
        return 12 * _MiB, 96 * _MiB
    # v7x: 64 MiB physical.  Keep the f32 compute tile ~3-4 MiB and leave
    # headroom for the double-buffered in/out tiles + compiler scratch.
    return 3 * _MiB + _MiB // 2, 44 * _MiB


def _global_norm_kernel(x_ref, o_ref, *, n_valid):
    # Block: (rows, n_pad), lane-dense last dim; lanes >= n_valid are zero pad.
    x = x_ref[...].astype(jnp.float32)
    n_pad = x.shape[-1]

    # Per-sample mean.  Wrapper zero-pads extra lanes, so the unmasked sum is
    # exact; multiply by compile-time 1/n instead of dividing.
    mean = jnp.sum(x, axis=-1, keepdims=True) * (1.0 / n_valid)
    diff = x - mean

    if n_valid != n_pad:
        col = jax.lax.broadcasted_iota(jnp.int32, x.shape, 1)
        d = jnp.where(col < n_valid, diff, 0.0)
    else:
        d = diff

    # Unbiased variance (ddof=1, matches torch.std default).  Two-pass form is
    # numerically safer than the fused sum/sumsq formula.  (n == 1 is a
    # degenerate case torch answers with NaN; guarded only to avoid a
    # trace-time divide-by-zero.)
    var = jnp.sum(d * d, axis=-1, keepdims=True) * (1.0 / max(n_valid - 1, 1))
    denom = jnp.sqrt(var) + 1e-6

    # EUP reciprocal (free bundle slot) + one Newton step on the (rows, 1)
    # column -> ~f32-exact 1/(std+eps), then a single broadcast multiply.
    inv = pl.reciprocal(denom, approx=True)
    inv = inv * (2.0 - denom * inv)

    o_ref[...] = (diff * inv).astype(o_ref.dtype)


def _global_norm_chunked_kernel(x_ref, o_ref, mean_sc, m2_sc, *,
                                n_chunks, chunk_n, n_valid):
    # Grid axis 1 has 2*n_chunks steps:
    #   k <  n_chunks : accumulate per-row streaming statistics (Chan combine)
    #   k >= n_chunks : re-read each chunk and write the normalized output.
    k = pl.program_id(1)
    x = x_ref[...].astype(jnp.float32)

    @pl.when(k == 0)
    def _():
        mean_sc[...] = jnp.zeros_like(mean_sc)
        m2_sc[...] = jnp.zeros_like(m2_sc)

    @pl.when(k < n_chunks)
    def _():
        chunk_idx = k % n_chunks
        col0 = chunk_idx * chunk_n
        col = col0 + jax.lax.broadcasted_iota(jnp.int32, x.shape, 1)
        mask = col < n_valid
        n_b = jnp.minimum(chunk_n, n_valid - col0).astype(jnp.float32)
        n_a = (chunk_idx * chunk_n).astype(jnp.float32)

        xm = jnp.where(mask, x, 0.0)
        m_c = jnp.sum(xm, axis=-1, keepdims=True) / n_b
        d_c = jnp.where(mask, x - m_c, 0.0)
        m2_c = jnp.sum(d_c * d_c, axis=-1, keepdims=True)

        delta = m_c - mean_sc[...]
        total = n_a + n_b
        mean_sc[...] = mean_sc[...] + delta * (n_b / total)
        m2_sc[...] = m2_sc[...] + m2_c + (delta * delta) * (n_a * n_b / total)

    @pl.when(k == n_chunks)
    def _():
        var = m2_sc[...] * (1.0 / max(n_valid - 1, 1))
        denom = jnp.sqrt(var) + 1e-6
        inv = pl.reciprocal(denom, approx=True)
        m2_sc[...] = inv * (2.0 - denom * inv)   # scratch now holds 1/(std+eps)

    @pl.when(k >= n_chunks)
    def _():
        o_ref[...] = ((x - mean_sc[...]) * m2_sc[...]).astype(o_ref.dtype)


def global_normalization(x, *, tile_budget_bytes=None, vmem_cap_bytes=None):
    """Globally normalize each sample of x with shape (B, C, L)."""
    B, C, L = x.shape
    N = C * L
    itemsize = jnp.dtype(x.dtype).itemsize

    auto_budget, auto_cap = _vmem_budgets()
    tile_budget = auto_budget if tile_budget_bytes is None else tile_budget_bytes
    vmem_cap = auto_cap if vmem_cap_bytes is None else vmem_cap_bytes

    # Lane-dense flat layout: whole per-sample reduction axis on lanes, padded
    # to a multiple of 128 so stores are unmasked vst (not vst.msk).
    N_pad = _round_up(N, 128)
    x2 = x.reshape(B, N)

    min_rows = min(8, B)
    if min_rows * N_pad * 4 <= tile_budget:
        # -------- resident-row path: a block holds whole rows ---------------
        if N_pad != N:
            x2 = jnp.pad(x2, ((0, 0), (0, N_pad - N)))

        if B <= 8:
            block_rows = B        # sublane rule: multiple of 8 or full dim
        else:
            budget_rows = max(8, (tile_budget // (N_pad * 4)) // 8 * 8)
            target_rows = max(8, _round_up(pl.cdiv(B, _TARGET_STEPS), 8))
            block_rows = min(budget_rows, target_rows, _round_up(B, 8))

        grid = (pl.cdiv(B, block_rows),)
        # Exact VMEM accounting: 2x-buffered in + out (input dtype) + ~3x f32
        # compute block + margin, clamped to the per-generation cap.
        vmem_limit = int(min(vmem_cap,
                             max(16 * _MiB,
                                 4 * block_rows * N_pad * itemsize
                                 + 3 * block_rows * N_pad * 4 + 2 * _MiB)))
        cost = pl.CostEstimate(flops=6 * B * N, transcendentals=2 * B,
                               bytes_accessed=2 * B * N * itemsize)

        # TODO(synk): sweep pipeline_mode=pl.Buffered(3) on the input spec on
        # hardware (few-% DMA-jitter win; skip on v7x when VMEM is tight).
        out2 = pl.pallas_call(
            functools.partial(_global_norm_kernel, n_valid=N),
            out_shape=jax.ShapeDtypeStruct((B, N_pad), x.dtype),
            grid_spec=pltpu.PrefetchScalarGridSpec(
                num_scalar_prefetch=0,
                grid=grid,
                in_specs=[pl.BlockSpec((block_rows, N_pad), lambda b: (b, 0))],
                out_specs=pl.BlockSpec((block_rows, N_pad), lambda b: (b, 0)),
            ),
            compiler_params=pltpu.CompilerParams(
                dimension_semantics=("parallel",),
                vmem_limit_bytes=vmem_limit,
            ),
            cost_estimate=cost,
        )(x2)
    else:
        # -------- streaming path: chunk the (huge) per-sample axis ----------
        block_rows = min(8, B)
        chunk_n = (tile_budget // (4 * block_rows)) // 128 * 128
        chunk_n = max(128, min(chunk_n, N_pad))
        N_pad = _round_up(N, chunk_n)
        n_chunks = N_pad // chunk_n
        if N_pad != N:
            x2 = jnp.pad(x2, ((0, 0), (0, N_pad - N)))

        grid = (pl.cdiv(B, block_rows), 2 * n_chunks)
        vmem_limit = int(min(vmem_cap,
                             max(16 * _MiB,
                                 4 * block_rows * chunk_n * itemsize
                                 + 3 * block_rows * chunk_n * 4 + 2 * _MiB)))
        cost = pl.CostEstimate(flops=8 * B * N, transcendentals=2 * B,
                               bytes_accessed=3 * B * N * itemsize)

        out2 = pl.pallas_call(
            functools.partial(_global_norm_chunked_kernel,
                              n_chunks=n_chunks, chunk_n=chunk_n, n_valid=N),
            out_shape=jax.ShapeDtypeStruct((B, N_pad), x.dtype),
            grid_spec=pltpu.PrefetchScalarGridSpec(
                num_scalar_prefetch=0,
                grid=grid,
                in_specs=[pl.BlockSpec(
                    (block_rows, chunk_n),
                    lambda b, k: (b, k % n_chunks))],
                out_specs=pl.BlockSpec(
                    (block_rows, chunk_n),
                    lambda b, k: (b, jnp.maximum(k - n_chunks, 0))),
                scratch_shapes=[pltpu.VMEM((block_rows, 1), jnp.float32),
                                pltpu.VMEM((block_rows, 1), jnp.float32)],
            ),
            compiler_params=pltpu.CompilerParams(
                dimension_semantics=("parallel", "arbitrary"),
                vmem_limit_bytes=vmem_limit,
            ),
            cost_estimate=cost,
        )(x2)

    if out2.shape[1] != N:
        out2 = out2[:, :N]
    return out2.reshape(B, C, L)


if __name__ == "__main__":
    key = jax.random.PRNGKey(0)

    def reference(x):
        mean = jnp.mean(x, axis=(1, 2), keepdims=True)
        std = jnp.std(x, axis=(1, 2), keepdims=True, ddof=1)   # unbiased, like torch
        return (x - mean) / (std + 1e-6)

    # (B, C, L, kwargs): small (<128 lanes, padded), lane-dense, partial row
    # block (B not multiple of 8), and a forced streaming/chunked case.
    cases = [
        ((2, 4, 16), {}),
        ((4, 8, 128), {}),
        ((10, 3, 50), {}),
        ((8, 4, 200), {"tile_budget_bytes": 8192}),   # forces the chunked path
    ]
    for i, ((B, C, L), kw) in enumerate(cases):
        k = jax.random.fold_in(key, i)
        x = jax.random.normal(k, (B, C, L), dtype=jnp.float32) * 3.0 + 1.5

        out = jax.block_until_ready(global_normalization(x, **kw))
        ref = reference(x)

        assert out.shape == x.shape and out.dtype == x.dtype
        assert jnp.allclose(out, ref, atol=1e-4, rtol=1e-4), f"mismatch at {(B, C, L)}"

    print("KERNEL_OK")
</pallas_src>

<mosaic_0001>
module attributes {stable_mosaic.version = 11 : i64} {
  func.func @_global_norm_kernel(%arg0: i32, %arg1: memref<2x128xf32, #tpu.memory_space<vmem>>, %arg2: memref<2x128xf32, #tpu.memory_space<vmem>>) attributes {dimension_semantics = [#tpu.dimension_semantics<parallel>], iteration_bounds = array<i64: 1>, scalar_prefetch = 0 : i64, scratch_operands = 0 : i64, tpu.core_type = #tpu.core_type<tc>, window_params = [{transform_indices = @transform_0, window_bounds = array<i64: 2, 128>}, {transform_indices = @transform_1, window_bounds = array<i64: 2, 128>}]} {
    %c0 = arith.constant 0 : index
    %c0_0 = arith.constant 0 : index
    %0 = vector.load %arg1[%c0, %c0_0] : memref<2x128xf32, #tpu.memory_space<vmem>>, vector<2x128xf32>
    %cst = arith.constant dense<0.000000e+00> : vector<2xf32>
    %1 = vector.multi_reduction <add>, %0, %cst [1] : vector<2x128xf32> to vector<2xf32>
    %2 = vector.shape_cast %1 : vector<2xf32> to vector<2x1xf32>
    %cst_1 = arith.constant 1.562500e-02 : f32
    %3 = vector.broadcast %cst_1 : f32 to vector<2x1xf32>
    %4 = arith.mulf %2, %3 : vector<2x1xf32>
    %5 = vector.broadcast %4 : vector<2x1xf32> to vector<2x128xf32>
    %6 = arith.subf %0, %5 : vector<2x128xf32>
    %7 = tpu.iota {dimensions = array<i32: 1>} : vector<2x128xi32>
    %c64_i32 = arith.constant 64 : i32
    %8 = vector.broadcast %c64_i32 : i32 to vector<2x128xi32>
    %9 = arith.cmpi slt, %7, %8 : vector<2x128xi32>
    %cst_2 = arith.constant 0.000000e+00 : f32
    %10 = vector.broadcast %cst_2 : f32 to vector<2x128xf32>
    %11 = arith.select %9, %6, %10 : vector<2x128xi1>, vector<2x128xf32>
    %12 = arith.mulf %11, %11 : vector<2x128xf32>
    %cst_3 = arith.constant dense<0.000000e+00> : vector<2xf32>
    %13 = vector.multi_reduction <add>, %12, %cst_3 [1] : vector<2x128xf32> to vector<2xf32>
    %14 = vector.shape_cast %13 : vector<2xf32> to vector<2x1xf32>
    %cst_4 = arith.constant 0.0158730168 : f32
    %15 = vector.broadcast %cst_4 : f32 to vector<2x1xf32>
    %16 = arith.mulf %14, %15 : vector<2x1xf32>
    %17 = math.sqrt %16 : vector<2x1xf32>
    %cst_5 = arith.constant 9.99999997E-7 : f32
    %18 = vector.broadcast %cst_5 : f32 to vector<2x1xf32>
    %19 = arith.addf %17, %18 : vector<2x1xf32>
    %20 = tpu.reciprocal %19 {approx = true} : vector<2x1xf32> -> vector<2x1xf32>
    %21 = arith.mulf %19, %20 : vector<2x1xf32>
    %cst_6 = arith.constant 2.000000e+00 : f32
    %22 = vector.broadcast %cst_6 : f32 to vector<2x1xf32>
    %23 = arith.subf %22, %21 : vector<2x1xf32>
    %24 = arith.mulf %20, %23 : vector<2x1xf32>
    %25 = vector.broadcast %24 : vector<2x1xf32> to vector<2x128xf32>
    %26 = arith.mulf %6, %25 : vector<2x128xf32>
    %c0_7 = arith.constant 0 : index
    %c0_8 = arith.constant 0 : index
    %27 = vector.load %arg2[%c0_7, %c0_8] : memref<2x128xf32, #tpu.memory_space<vmem>>, vector<2x128xf32>
    tpu.vector_store %arg2[%c0_7, %c0_8], %26 {strides = array<i32>} : memref<2x128xf32, #tpu.memory_space<vmem>>, vector<2x128xf32>,
    return
  }
  func.func @transform_0(%arg0: i32) -> (i32, i32) {
    %c0_i32 = arith.constant 0 : i32
    %c0_i32_0 = arith.constant 0 : i32
    return %arg0, %c0_i32 : i32, i32
  }
  func.func @transform_1(%arg0: i32) -> (i32, i32) {
    %c0_i32 = arith.constant 0 : i32
    %c0_i32_0 = arith.constant 0 : i32
    return %arg0, %c0_i32 : i32, i32
  }
}

</mosaic_0001>

<llo_original>
// kernel: tpu_custom_call.1
$region0: #{tpu_custom_call.1}
  #allocation0 [shape = 'u32[]', space=smem, size = 0x4, offset = 0x4, fixed_abs, tag = 'smem constant byte address 0x4 - core index']
  #allocation1 [shape = 'u32[72,128]{1,0:T(1,128)}', space=vmem, size = 0x9000, scoped, tag = 'internal scratch']
  %s0 = inlined_call_operand.hbm [shape: f32[2,128], index: 0, kind: input, shape index: {}]
  %s1 = inlined_call_operand.hbm [shape: f32[2,128], index: 1, kind: output, shape index: {}]
  %s2 = sld [smem:[#allocation0]]
  $region18: #{tpu_custom_call.1} parent=0
    _
  %s4 = ssub.s32 1, %s2
  %s5 = scalar_select 0, %s4, %s2
  $region1: #{tpu_custom_call.1} parent=0
    #allocation2 [shape = 'u8[1024]{0}', space=vmem, size = 0x400, scoped, tag = 'input window, operand 0, single buffered']
    #allocation3 [shape = 's32[1]{0}', space=sflag, size = 0x4, scoped, tag = 'scoped memory for tpu_custom_call.1']
    #allocation4 [shape = 's32[1]{0}', space=sflag, size = 0x4, scoped, tag = 'scoped memory for tpu_custom_call.1']
    #allocation5 [shape = 'u8[1024]{0}', space=vmem, size = 0x400, scoped, tag = 'output window, operand 0, single buffered']
    %6 = vsyncpa [#allocation3], 0
    %7 = vsyncpa [#allocation4], 0
    // Predicated region
    $region2: #{tpu_custom_call.1} parent=1 // pred_check
      _
    $region3: #{tpu_custom_call.1} parent=1 // pred_check_branch
      %9 = sbr.rel (0) target = $region5
    $region4: #{tpu_custom_call.1} parent=1 // pred_region
      %11 = vsyncadd [#allocation3], 0
      %s13 = sshll.u32 %s0, 4
      %s14 = int_to_ptr.hbm [resolvable:$true] %s13
      %s15 = sshll.u32 [#allocation2], 4
      %s16 = int_to_ptr.vmem [resolvable:$true] %s15
      %18 = dma.hbm_to_vmem [thread:$0]  %s14, 32, %s16, [#allocation3]
    $region5: #{tpu_custom_call.1} parent=1 // pred_fallthru
      _
    // Predicated region
    $region6: #{tpu_custom_call.1} parent=1 // pred_check
      _
    $region7: #{tpu_custom_call.1} parent=1 // pred_check_branch
      %20 = sbr.rel (0) target = $region9
    $region8: #{tpu_custom_call.1} parent=1 // pred_region
      %22 = dma.done [#allocation3], 32
    $region9: #{tpu_custom_call.1} parent=1 // pred_fallthru
      _
    %v23 = vld [vmem:[#allocation2] sm:$0x3]
    %vm24 = vcmask 1041408
    %v25 = vsel %vm24, %v23, 0.0
    %26 = vadd.xlane.f32.xlu0 %v25
    %v27 = vpop.xlane.xlu0 %26
    %v28 = vmul.f32 %v27, 0.015625
    %v29 = vsub.f32 %v23, %v28
    %v30 = vlaneseq
    %v31 = vand.u32 %v30, 127
    %vm32 = vcmp.lt.s32.totalorder %v31, 64
    %v33 = vsel %vm32, %v29, 0.0
    %v34 = vmul.f32 %v33, %v33
    %v35 = vsel %vm24, %v34, 0.0
    %36 = vadd.xlane.f32.xlu0 %v35
    %v37 = vpop.xlane.xlu0 %36
    %v38 = vmul.f32 %v37, 0.015873017
    %v39 = vrsqrt.pop %v38
    %v40 = vmul.f32 %v39, %v38
    %v41 = vmul.f32 %v40, %v39
    %v42 = vmul.f32 0.5, %v41
    %v43 = vsub.f32 1.5, %v42
    %v44 = vmul.f32 %v39, %v43
    %v45 = vmul.f32 %v38, %v44
    %vm46 = vcmp.eq.f32.partialorder %v38, inf
    %v47 = vsel %vm46, %v38, %v45
    %vm48 = vcmp.eq.f32.partialorder %v38, 0.0
    %v49 = vand.u32 %v38, 2147483648
    %v50 = vsel %vm48, %v49, %v47
    %v51 = vadd.f32 %v50, 1e-06
    %v52 = vrcp.pop %v51
    %v53 = vmul.f32 %v51, %v52
    %v54 = vsub.f32 2.0, %v53
    %v55 = vmul.f32 %v52, %v54
    %v56 = vmul.f32 %v29, %v55
    %57 = vst [vmem:[#allocation5] sm:$0x3] %v56
    // Predicated region
    $region10: #{tpu_custom_call.1} parent=1 // pred_check
      _
    $region11: #{tpu_custom_call.1} parent=1 // pred_check_branch
      %59 = sbr.rel (0) target = $region13
    $region12: #{tpu_custom_call.1} parent=1 // pred_region
      %61 = vsyncadd [#allocation4], 0
      %s63 = sshll.u32 [#allocation5], 4
      %s64 = int_to_ptr.vmem [resolvable:$true] %s63
      %s65 = sshll.u32 %s1, 4
      %s66 = int_to_ptr.hbm [resolvable:$true] %s65
      %68 = dma.vmem_to_hbm [thread:$0]  %s64, 32, %s66, [#allocation4]
    $region13: #{tpu_custom_call.1} parent=1 // pred_fallthru
      _
    // Predicated region
    $region14: #{tpu_custom_call.1} parent=1 // pred_check
      _
    $region15: #{tpu_custom_call.1} parent=1 // pred_check_branch
      %70 = sbr.rel (0) target = $region17
    $region16: #{tpu_custom_call.1} parent=1 // pred_region
      %72 = dma.done [#allocation4], 32
    $region17: #{tpu_custom_call.1} parent=1 // pred_fallthru
      _
    %73 = vsyncpa [#allocation3], 1
    %74 = vsyncpa [#allocation4], 1

</llo_original>
